<compile_context>
chip_gen: v7x
topology: tpu7x:2x2x1
jax: 0.10.0
libtpu: 0.0.40
codegen_flags: <defaults>
</compile_context>

<pallas_src>
import jax
import jax.numpy as jnp
from jax.experimental import pallas as pl
from jax.experimental.pallas import tpu as pltpu


def _make_kernel(B, C, N):
    EPS_IN = 1e-3   # InstanceNorm1d eps
    EPS_BN = 1e-5   # BatchNorm1d eps
    f32 = jnp.float32

    def kernel(x_ref, slab_ref, out_ref):

        def block(hin, w, gamma, beta):
            # 1x1 conv over the fused B*N lane axis: ONE MXU matmul.
            # (conv bias dropped: exactly cancelled by instance-norm mean subtraction)
            h = jnp.dot(w, hin, preferred_element_type=f32)            # (Cout, B*N)

            # Single-pass per-(c, b) instance statistics (mean & mean-of-squares together).
            hbs, mus, invs, vars_ = [], [], [], []
            for b in range(B):                                         # B is static & tiny
                hb = h[:, b * N:(b + 1) * N]                           # (Cout, N) lane slice
                mu_b = jnp.mean(hb, axis=1, keepdims=True)             # (Cout, 1)
                ms_b = jnp.mean(hb * hb, axis=1, keepdims=True)        # (Cout, 1)
                var_b = jnp.maximum(ms_b - mu_b * mu_b, 0.0)           # biased var, clamped >= 0
                hbs.append(hb)
                mus.append(mu_b)
                vars_.append(var_b)
                invs.append(jax.lax.rsqrt(var_b + EPS_IN))

            # BatchNorm folded analytically: instance-normalized data has exactly zero
            # per-channel batch mean, and its biased batch variance over (B, N) is
            # mean_b[ var_b / (var_b + eps_in) ].  BN becomes a per-channel scale/shift.
            bn_var = sum(vars_[b] * invs[b] * invs[b] for b in range(B)) * (1.0 / B)
            g = jax.lax.rsqrt(bn_var + EPS_BN) * gamma                 # (Cout, 1)

            # Fused normalize + BN affine + ReLU: one elementwise pass over the data.
            outs = []
            for b in range(B):
                scale_b = invs[b] * g                                  # (Cout, 1)
                shift_b = beta - mus[b] * scale_b                      # (Cout, 1)
                outs.append(jnp.maximum(hbs[b] * scale_b + shift_b, 0.0))
            return outs                                                # list of B x (Cout, N)

        x = x_ref[...]                                                 # (C, B*N)

        # Static slices into the packed parameter slab (row groups 8-sublane aligned).
        h = jnp.concatenate(
            block(x,
                  slab_ref[0:64, 0:C],                                 # w1 (64, C)
                  slab_ref[0:64, C:C + 1],                             # gamma1 (64, 1)
                  slab_ref[0:64, C + 1:C + 2]),                        # beta1  (64, 1)
            axis=1)                                                    # (64, B*N)
        h = jnp.concatenate(
            block(h,
                  slab_ref[64:80, 0:64],                               # w2 (16, 64)
                  slab_ref[64:80, 64:65],
                  slab_ref[64:80, 65:66]),
            axis=1)                                                    # (16, B*N)
        outs3 = block(h,
                      slab_ref[80:84, 0:16],                           # w3 (4, 16)
                      slab_ref[80:84, 16:17],
                      slab_ref[80:84, 17:18])                          # list of B x (4, N)

        # Final 4 -> 1 conv as a VPU weighted sum + 4-sublane reduce, written per-batch
        # straight into the lane-dense (1, B*N) output (no extra concatenate/copy).
        w4 = slab_ref[88:92, 0:1]                                      # (4, 1)
        b4 = slab_ref[88:89, 1:2]                                      # (1, 1)
        for b in range(B):
            out_ref[:, b * N:(b + 1) * N] = (
                jnp.sum(outs3[b] * w4, axis=0, keepdims=True) + b4)    # (1, N)

    return kernel


def inliner_predictor(x, params):
    (w1, b1, g1, be1, w2, b2, g2, be2, w3, b3, g3, be3, w4, b4) = params
    del b1, b2, b3  # exactly cancelled by the following InstanceNorm -> dead work, dropped
    B, C, N = x.shape
    BN = B * N
    assert C + 2 <= 128, "first-layer channel count must fit the 128-lane parameter slab"

    # NCW -> (Cin, B*N): a single relayout in XLA so each conv is one wide matmul.
    x2 = jnp.transpose(x, (1, 0, 2)).reshape(C, BN).astype(jnp.float32)

    # Pack all weights / affine params into a single (96, 128) VMEM slab (one DMA),
    # with each parameter group starting on an 8-sublane boundary.
    slab = jnp.zeros((96, 128), jnp.float32)
    slab = slab.at[0:64, 0:C].set(w1)
    slab = slab.at[0:64, C].set(g1[:, 0])
    slab = slab.at[0:64, C + 1].set(be1[:, 0])
    slab = slab.at[64:80, 0:64].set(w2)
    slab = slab.at[64:80, 64].set(g2[:, 0])
    slab = slab.at[64:80, 65].set(be2[:, 0])
    slab = slab.at[80:84, 0:16].set(w3)
    slab = slab.at[80:84, 16].set(g3[:, 0])
    slab = slab.at[80:84, 17].set(be3[:, 0])
    slab = slab.at[88:92, 0].set(w4[0, :])
    slab = slab.at[88, 1].set(b4[0, 0])

    out2 = pl.pallas_call(
        _make_kernel(B, C, N),
        out_shape=jax.ShapeDtypeStruct((1, BN), jnp.float32),
        in_specs=[pl.BlockSpec(memory_space=pltpu.MemorySpace.VMEM),
                  pl.BlockSpec(memory_space=pltpu.MemorySpace.VMEM)],
        out_specs=pl.BlockSpec(memory_space=pltpu.MemorySpace.VMEM),
    )(x2, slab)

    # lane-dense (1, B*N) -> NCW (B, 1, N)
    return out2.reshape(B, N)[:, None, :]


def _reference(x, params):
    # Pure-JAX reference with the full PyTorch (train-mode) semantics, including conv biases.
    (w1, b1, g1, be1, w2, b2, g2, be2, w3, b3, g3, be3, w4, b4) = params

    def conv(h, w, b):
        return jnp.einsum("oc,bcn->bon", w, h) + b[None, :, :]

    def inorm(h):
        mu = jnp.mean(h, -1, keepdims=True)
        var = jnp.mean((h - mu) ** 2, -1, keepdims=True)
        return (h - mu) / jnp.sqrt(var + 1e-3)

    def bnorm(h, g, be):
        mu = jnp.mean(h, (0, 2), keepdims=True)
        var = jnp.mean((h - mu) ** 2, (0, 2), keepdims=True)
        return (h - mu) / jnp.sqrt(var + 1e-5) * g[None] + be[None]

    def blk(h, w, b, g, be):
        return jax.nn.relu(bnorm(inorm(conv(h, w, b)), g, be))

    h = blk(x, w1, b1, g1, be1)
    h = blk(h, w2, b2, g2, be2)
    h = blk(h, w3, b3, g3, be3)
    return conv(h, w4, b4)


if __name__ == "__main__":
    B, C, N = 2, 4, 128
    key = jax.random.PRNGKey(0)
    ks = jax.random.split(key, 16)

    def rnd(k, shape, scale=0.1):
        return (scale * jax.random.normal(k, shape)).astype(jnp.float32)

    x = jax.random.normal(ks[0], (B, C, N), jnp.float32)

    # Conv1d weights stored as (Cout, Cin) (kernel_size=1 squeezed);
    # biases / BN affine params stored as (Cout, 1).
    w1, b1 = rnd(ks[1], (64, C)), rnd(ks[2], (64, 1))
    g1, be1 = 1.0 + rnd(ks[3], (64, 1)), rnd(ks[4], (64, 1))
    w2, b2 = rnd(ks[5], (16, 64)), rnd(ks[6], (16, 1))
    g2, be2 = 1.0 + rnd(ks[7], (16, 1)), rnd(ks[8], (16, 1))
    w3, b3 = rnd(ks[9], (4, 16)), rnd(ks[10], (4, 1))
    g3, be3 = 1.0 + rnd(ks[11], (4, 1)), rnd(ks[12], (4, 1))
    w4, b4 = rnd(ks[13], (1, 4)), rnd(ks[14], (1, 1))

    params = (w1, b1, g1, be1, w2, b2, g2, be2, w3, b3, g3, be3, w4, b4)

    out = jax.jit(inliner_predictor)(x, params)
    jax.block_until_ready(out)
    assert out.shape == (B, 1, N) and out.dtype == jnp.float32

    ref = _reference(x, params)
    assert jnp.allclose(out, ref, rtol=1e-3, atol=1e-3), "mismatch vs JAX reference"

    print("KERNEL_OK")
</pallas_src>

<mosaic_0001>
module attributes {stable_mosaic.version = 11 : i64} {
  func.func @kernel(%arg0: memref<4x256xf32, #tpu.memory_space<vmem>>, %arg1: memref<96x128xf32, #tpu.memory_space<vmem>>, %arg2: memref<1x256xf32, #tpu.memory_space<vmem>>) attributes {dimension_semantics = [], scalar_prefetch = 0 : i64, scratch_operands = 0 : i64, tpu.core_type = #tpu.core_type<tc>} {
    %c0 = arith.constant 0 : index
    %c0_0 = arith.constant 0 : index
    %0 = vector.load %arg0[%c0, %c0_0] : memref<4x256xf32, #tpu.memory_space<vmem>>, vector<4x256xf32>
    %c0_1 = arith.constant 0 : index
    %c0_2 = arith.constant 0 : index
    %1 = vector.load %arg1[%c0_1, %c0_2] : memref<96x128xf32, #tpu.memory_space<vmem>>, vector<64x4xf32>
    %c0_3 = arith.constant 0 : index
    %c4 = arith.constant 4 : index
    %2 = vector.load %arg1[%c0_3, %c4] : memref<96x128xf32, #tpu.memory_space<vmem>>, vector<64x1xf32>
    %c0_4 = arith.constant 0 : index
    %c5 = arith.constant 5 : index
    %3 = vector.load %arg1[%c0_4, %c5] : memref<96x128xf32, #tpu.memory_space<vmem>>, vector<64x1xf32>
    %cst = arith.constant dense<0.000000e+00> : vector<64x256xf32>
    %4 = tpu.matmul %1, %0, %cst {dimension_numbers = #tpu.dot_dimension_numbers<[1], [0], [0], [1], [0, 0, 1, 1], [], []>} : vector<64x4xf32>, vector<4x256xf32>, vector<64x256xf32> -> vector<64x256xf32>
    %5 = vector.extract_strided_slice %4 {offsets = [0, 0], sizes = [64, 128], strides = [1, 1]} : vector<64x256xf32> to vector<64x128xf32>
    %cst_5 = arith.constant dense<0.000000e+00> : vector<64xf32>
    %6 = vector.multi_reduction <add>, %5, %cst_5 [1] : vector<64x128xf32> to vector<64xf32>
    %7 = vector.shape_cast %6 : vector<64xf32> to vector<64x1xf32>
    %cst_6 = arith.constant 1.280000e+02 : f32
    %8 = vector.broadcast %cst_6 : f32 to vector<64x1xf32>
    %9 = arith.divf %7, %8 : vector<64x1xf32>
    %10 = arith.mulf %5, %5 : vector<64x128xf32>
    %cst_7 = arith.constant dense<0.000000e+00> : vector<64xf32>
    %11 = vector.multi_reduction <add>, %10, %cst_7 [1] : vector<64x128xf32> to vector<64xf32>
    %12 = vector.shape_cast %11 : vector<64xf32> to vector<64x1xf32>
    %cst_8 = arith.constant 1.280000e+02 : f32
    %13 = vector.broadcast %cst_8 : f32 to vector<64x1xf32>
    %14 = arith.divf %12, %13 : vector<64x1xf32>
    %15 = arith.mulf %9, %9 : vector<64x1xf32>
    %16 = arith.subf %14, %15 : vector<64x1xf32>
    %cst_9 = arith.constant 0.000000e+00 : f32
    %17 = vector.broadcast %cst_9 : f32 to vector<64x1xf32>
    %18 = arith.maximumf %16, %17 : vector<64x1xf32>
    %cst_10 = arith.constant 1.000000e-03 : f32
    %19 = vector.broadcast %cst_10 : f32 to vector<64x1xf32>
    %20 = arith.addf %18, %19 : vector<64x1xf32>
    %21 = math.rsqrt %20 : vector<64x1xf32>
    %22 = vector.extract_strided_slice %4 {offsets = [0, 128], sizes = [64, 128], strides = [1, 1]} : vector<64x256xf32> to vector<64x128xf32>
    %cst_11 = arith.constant dense<0.000000e+00> : vector<64xf32>
    %23 = vector.multi_reduction <add>, %22, %cst_11 [1] : vector<64x128xf32> to vector<64xf32>
    %24 = vector.shape_cast %23 : vector<64xf32> to vector<64x1xf32>
    %cst_12 = arith.constant 1.280000e+02 : f32
    %25 = vector.broadcast %cst_12 : f32 to vector<64x1xf32>
    %26 = arith.divf %24, %25 : vector<64x1xf32>
    %27 = arith.mulf %22, %22 : vector<64x128xf32>
    %cst_13 = arith.constant dense<0.000000e+00> : vector<64xf32>
    %28 = vector.multi_reduction <add>, %27, %cst_13 [1] : vector<64x128xf32> to vector<64xf32>
    %29 = vector.shape_cast %28 : vector<64xf32> to vector<64x1xf32>
    %cst_14 = arith.constant 1.280000e+02 : f32
    %30 = vector.broadcast %cst_14 : f32 to vector<64x1xf32>
    %31 = arith.divf %29, %30 : vector<64x1xf32>
    %32 = arith.mulf %26, %26 : vector<64x1xf32>
    %33 = arith.subf %31, %32 : vector<64x1xf32>
    %cst_15 = arith.constant 0.000000e+00 : f32
    %34 = vector.broadcast %cst_15 : f32 to vector<64x1xf32>
    %35 = arith.maximumf %33, %34 : vector<64x1xf32>
    %cst_16 = arith.constant 1.000000e-03 : f32
    %36 = vector.broadcast %cst_16 : f32 to vector<64x1xf32>
    %37 = arith.addf %35, %36 : vector<64x1xf32>
    %38 = math.rsqrt %37 : vector<64x1xf32>
    %39 = arith.mulf %18, %21 : vector<64x1xf32>
    %40 = arith.mulf %39, %21 : vector<64x1xf32>
    %cst_17 = arith.constant 0.000000e+00 : f32
    %41 = vector.broadcast %cst_17 : f32 to vector<64x1xf32>
    %42 = arith.addf %41, %40 : vector<64x1xf32>
    %43 = arith.mulf %35, %38 : vector<64x1xf32>
    %44 = arith.mulf %43, %38 : vector<64x1xf32>
    %45 = arith.addf %42, %44 : vector<64x1xf32>
    %cst_18 = arith.constant 5.000000e-01 : f32
    %46 = vector.broadcast %cst_18 : f32 to vector<64x1xf32>
    %47 = arith.mulf %45, %46 : vector<64x1xf32>
    %cst_19 = arith.constant 9.99999974E-6 : f32
    %48 = vector.broadcast %cst_19 : f32 to vector<64x1xf32>
    %49 = arith.addf %47, %48 : vector<64x1xf32>
    %50 = math.rsqrt %49 : vector<64x1xf32>
    %51 = arith.mulf %50, %2 : vector<64x1xf32>
    %52 = arith.mulf %21, %51 : vector<64x1xf32>
    %53 = arith.mulf %9, %52 : vector<64x1xf32>
    %54 = arith.subf %3, %53 : vector<64x1xf32>
    %55 = vector.broadcast %52 : vector<64x1xf32> to vector<64x128xf32>
    %56 = arith.mulf %5, %55 : vector<64x128xf32>
    %57 = vector.broadcast %54 : vector<64x1xf32> to vector<64x128xf32>
    %58 = arith.addf %56, %57 : vector<64x128xf32>
    %cst_20 = arith.constant 0.000000e+00 : f32
    %59 = vector.broadcast %cst_20 : f32 to vector<64x128xf32>
    %60 = arith.maximumf %58, %59 : vector<64x128xf32>
    %61 = arith.mulf %38, %51 : vector<64x1xf32>
    %62 = arith.mulf %26, %61 : vector<64x1xf32>
    %63 = arith.subf %3, %62 : vector<64x1xf32>
    %64 = vector.broadcast %61 : vector<64x1xf32> to vector<64x128xf32>
    %65 = arith.mulf %22, %64 : vector<64x128xf32>
    %66 = vector.broadcast %63 : vector<64x1xf32> to vector<64x128xf32>
    %67 = arith.addf %65, %66 : vector<64x128xf32>
    %cst_21 = arith.constant 0.000000e+00 : f32
    %68 = vector.broadcast %cst_21 : f32 to vector<64x128xf32>
    %69 = arith.maximumf %67, %68 : vector<64x128xf32>
    %70 = tpu.concatenate %60, %69 in 1 : vector<64x128xf32>, vector<64x128xf32> -> vector<64x256xf32>
    %c64 = arith.constant 64 : index
    %c0_22 = arith.constant 0 : index
    %71 = vector.load %arg1[%c64, %c0_22] : memref<96x128xf32, #tpu.memory_space<vmem>>, vector<16x64xf32>
    %c64_23 = arith.constant 64 : index
    %c64_24 = arith.constant 64 : index
    %72 = vector.load %arg1[%c64_23, %c64_24] : memref<96x128xf32, #tpu.memory_space<vmem>>, vector<16x1xf32>
    %c64_25 = arith.constant 64 : index
    %c65 = arith.constant 65 : index
    %73 = vector.load %arg1[%c64_25, %c65] : memref<96x128xf32, #tpu.memory_space<vmem>>, vector<16x1xf32>
    %cst_26 = arith.constant dense<0.000000e+00> : vector<16x256xf32>
    %74 = tpu.matmul %71, %70, %cst_26 {dimension_numbers = #tpu.dot_dimension_numbers<[1], [0], [0], [1], [0, 0, 1, 1], [], []>} : vector<16x64xf32>, vector<64x256xf32>, vector<16x256xf32> -> vector<16x256xf32>
    %75 = vector.extract_strided_slice %74 {offsets = [0, 0], sizes = [16, 128], strides = [1, 1]} : vector<16x256xf32> to vector<16x128xf32>
    %cst_27 = arith.constant dense<0.000000e+00> : vector<16xf32>
    %76 = vector.multi_reduction <add>, %75, %cst_27 [1] : vector<16x128xf32> to vector<16xf32>
    %77 = vector.shape_cast %76 : vector<16xf32> to vector<16x1xf32>
    %cst_28 = arith.constant 1.280000e+02 : f32
    %78 = vector.broadcast %cst_28 : f32 to vector<16x1xf32>
    %79 = arith.divf %77, %78 : vector<16x1xf32>
    %80 = arith.mulf %75, %75 : vector<16x128xf32>
    %cst_29 = arith.constant dense<0.000000e+00> : vector<16xf32>
    %81 = vector.multi_reduction <add>, %80, %cst_29 [1] : vector<16x128xf32> to vector<16xf32>
    %82 = vector.shape_cast %81 : vector<16xf32> to vector<16x1xf32>
    %cst_30 = arith.constant 1.280000e+02 : f32
    %83 = vector.broadcast %cst_30 : f32 to vector<16x1xf32>
    %84 = arith.divf %82, %83 : vector<16x1xf32>
    %85 = arith.mulf %79, %79 : vector<16x1xf32>
    %86 = arith.subf %84, %85 : vector<16x1xf32>
    %cst_31 = arith.constant 0.000000e+00 : f32
    %87 = vector.broadcast %cst_31 : f32 to vector<16x1xf32>
    %88 = arith.maximumf %86, %87 : vector<16x1xf32>
    %cst_32 = arith.constant 1.000000e-03 : f32
    %89 = vector.broadcast %cst_32 : f32 to vector<16x1xf32>
    %90 = arith.addf %88, %89 : vector<16x1xf32>
    %91 = math.rsqrt %90 : vector<16x1xf32>
    %92 = vector.extract_strided_slice %74 {offsets = [0, 128], sizes = [16, 128], strides = [1, 1]} : vector<16x256xf32> to vector<16x128xf32>
    %cst_33 = arith.constant dense<0.000000e+00> : vector<16xf32>
    %93 = vector.multi_reduction <add>, %92, %cst_33 [1] : vector<16x128xf32> to vector<16xf32>
    %94 = vector.shape_cast %93 : vector<16xf32> to vector<16x1xf32>
    %cst_34 = arith.constant 1.280000e+02 : f32
    %95 = vector.broadcast %cst_34 : f32 to vector<16x1xf32>
    %96 = arith.divf %94, %95 : vector<16x1xf32>
    %97 = arith.mulf %92, %92 : vector<16x128xf32>
    %cst_35 = arith.constant dense<0.000000e+00> : vector<16xf32>
    %98 = vector.multi_reduction <add>, %97, %cst_35 [1] : vector<16x128xf32> to vector<16xf32>
    %99 = vector.shape_cast %98 : vector<16xf32> to vector<16x1xf32>
    %cst_36 = arith.constant 1.280000e+02 : f32
    %100 = vector.broadcast %cst_36 : f32 to vector<16x1xf32>
    %101 = arith.divf %99, %100 : vector<16x1xf32>
    %102 = arith.mulf %96, %96 : vector<16x1xf32>
    %103 = arith.subf %101, %102 : vector<16x1xf32>
    %cst_37 = arith.constant 0.000000e+00 : f32
    %104 = vector.broadcast %cst_37 : f32 to vector<16x1xf32>
    %105 = arith.maximumf %103, %104 : vector<16x1xf32>
    %cst_38 = arith.constant 1.000000e-03 : f32
    %106 = vector.broadcast %cst_38 : f32 to vector<16x1xf32>
    %107 = arith.addf %105, %106 : vector<16x1xf32>
    %108 = math.rsqrt %107 : vector<16x1xf32>
    %109 = arith.mulf %88, %91 : vector<16x1xf32>
    %110 = arith.mulf %109, %91 : vector<16x1xf32>
    %cst_39 = arith.constant 0.000000e+00 : f32
    %111 = vector.broadcast %cst_39 : f32 to vector<16x1xf32>
    %112 = arith.addf %111, %110 : vector<16x1xf32>
    %113 = arith.mulf %105, %108 : vector<16x1xf32>
    %114 = arith.mulf %113, %108 : vector<16x1xf32>
    %115 = arith.addf %112, %114 : vector<16x1xf32>
    %cst_40 = arith.constant 5.000000e-01 : f32
    %116 = vector.broadcast %cst_40 : f32 to vector<16x1xf32>
    %117 = arith.mulf %115, %116 : vector<16x1xf32>
    %cst_41 = arith.constant 9.99999974E-6 : f32
    %118 = vector.broadcast %cst_41 : f32 to vector<16x1xf32>
    %119 = arith.addf %117, %118 : vector<16x1xf32>
    %120 = math.rsqrt %119 : vector<16x1xf32>
    %121 = arith.mulf %120, %72 : vector<16x1xf32>
    %122 = arith.mulf %91, %121 : vector<16x1xf32>
    %123 = arith.mulf %79, %122 : vector<16x1xf32>
    %124 = arith.subf %73, %123 : vector<16x1xf32>
    %125 = vector.broadcast %122 : vector<16x1xf32> to vector<16x128xf32>
    %126 = arith.mulf %75, %125 : vector<16x128xf32>
    %127 = vector.broadcast %124 : vector<16x1xf32> to vector<16x128xf32>
    %128 = arith.addf %126, %127 : vector<16x128xf32>
    %cst_42 = arith.constant 0.000000e+00 : f32
    %129 = vector.broadcast %cst_42 : f32 to vector<16x128xf32>
    %130 = arith.maximumf %128, %129 : vector<16x128xf32>
    %131 = arith.mulf %108, %121 : vector<16x1xf32>
    %132 = arith.mulf %96, %131 : vector<16x1xf32>
    %133 = arith.subf %73, %132 : vector<16x1xf32>
    %134 = vector.broadcast %131 : vector<16x1xf32> to vector<16x128xf32>
    %135 = arith.mulf %92, %134 : vector<16x128xf32>
    %136 = vector.broadcast %133 : vector<16x1xf32> to vector<16x128xf32>
    %137 = arith.addf %135, %136 : vector<16x128xf32>
    %cst_43 = arith.constant 0.000000e+00 : f32
    %138 = vector.broadcast %cst_43 : f32 to vector<16x128xf32>
    %139 = arith.maximumf %137, %138 : vector<16x128xf32>
    %140 = tpu.concatenate %130, %139 in 1 : vector<16x128xf32>, vector<16x128xf32> -> vector<16x256xf32>
    %c80 = arith.constant 80 : index
    %c0_44 = arith.constant 0 : index
    %141 = vector.load %arg1[%c80, %c0_44] : memref<96x128xf32, #tpu.memory_space<vmem>>, vector<4x16xf32>
    %c80_45 = arith.constant 80 : index
    %c16 = arith.constant 16 : index
    %142 = vector.load %arg1[%c80_45, %c16] : memref<96x128xf32, #tpu.memory_space<vmem>>, vector<4x1xf32>
    %c80_46 = arith.constant 80 : index
    %c17 = arith.constant 17 : index
    %143 = vector.load %arg1[%c80_46, %c17] : memref<96x128xf32, #tpu.memory_space<vmem>>, vector<4x1xf32>
    %cst_47 = arith.constant dense<0.000000e+00> : vector<4x256xf32>
    %144 = tpu.matmul %141, %140, %cst_47 {dimension_numbers = #tpu.dot_dimension_numbers<[1], [0], [0], [1], [0, 0, 1, 1], [], []>} : vector<4x16xf32>, vector<16x256xf32>, vector<4x256xf32> -> vector<4x256xf32>
    %145 = vector.extract_strided_slice %144 {offsets = [0, 0], sizes = [4, 128], strides = [1, 1]} : vector<4x256xf32> to vector<4x128xf32>
    %cst_48 = arith.constant dense<0.000000e+00> : vector<4xf32>
    %146 = vector.multi_reduction <add>, %145, %cst_48 [1] : vector<4x128xf32> to vector<4xf32>
    %147 = vector.shape_cast %146 : vector<4xf32> to vector<4x1xf32>
    %cst_49 = arith.constant 1.280000e+02 : f32
    %148 = vector.broadcast %cst_49 : f32 to vector<4x1xf32>
    %149 = arith.divf %147, %148 : vector<4x1xf32>
    %150 = arith.mulf %145, %145 : vector<4x128xf32>
    %cst_50 = arith.constant dense<0.000000e+00> : vector<4xf32>
    %151 = vector.multi_reduction <add>, %150, %cst_50 [1] : vector<4x128xf32> to vector<4xf32>
    %152 = vector.shape_cast %151 : vector<4xf32> to vector<4x1xf32>
    %cst_51 = arith.constant 1.280000e+02 : f32
    %153 = vector.broadcast %cst_51 : f32 to vector<4x1xf32>
    %154 = arith.divf %152, %153 : vector<4x1xf32>
    %155 = arith.mulf %149, %149 : vector<4x1xf32>
    %156 = arith.subf %154, %155 : vector<4x1xf32>
    %cst_52 = arith.constant 0.000000e+00 : f32
    %157 = vector.broadcast %cst_52 : f32 to vector<4x1xf32>
    %158 = arith.maximumf %156, %157 : vector<4x1xf32>
    %cst_53 = arith.constant 1.000000e-03 : f32
    %159 = vector.broadcast %cst_53 : f32 to vector<4x1xf32>
    %160 = arith.addf %158, %159 : vector<4x1xf32>
    %161 = math.rsqrt %160 : vector<4x1xf32>
    %162 = vector.extract_strided_slice %144 {offsets = [0, 128], sizes = [4, 128], strides = [1, 1]} : vector<4x256xf32> to vector<4x128xf32>
    %cst_54 = arith.constant dense<0.000000e+00> : vector<4xf32>
    %163 = vector.multi_reduction <add>, %162, %cst_54 [1] : vector<4x128xf32> to vector<4xf32>
    %164 = vector.shape_cast %163 : vector<4xf32> to vector<4x1xf32>
    %cst_55 = arith.constant 1.280000e+02 : f32
    %165 = vector.broadcast %cst_55 : f32 to vector<4x1xf32>
    %166 = arith.divf %164, %165 : vector<4x1xf32>
    %167 = arith.mulf %162, %162 : vector<4x128xf32>
    %cst_56 = arith.constant dense<0.000000e+00> : vector<4xf32>
    %168 = vector.multi_reduction <add>, %167, %cst_56 [1] : vector<4x128xf32> to vector<4xf32>
    %169 = vector.shape_cast %168 : vector<4xf32> to vector<4x1xf32>
    %cst_57 = arith.constant 1.280000e+02 : f32
    %170 = vector.broadcast %cst_57 : f32 to vector<4x1xf32>
    %171 = arith.divf %169, %170 : vector<4x1xf32>
    %172 = arith.mulf %166, %166 : vector<4x1xf32>
    %173 = arith.subf %171, %172 : vector<4x1xf32>
    %cst_58 = arith.constant 0.000000e+00 : f32
    %174 = vector.broadcast %cst_58 : f32 to vector<4x1xf32>
    %175 = arith.maximumf %173, %174 : vector<4x1xf32>
    %cst_59 = arith.constant 1.000000e-03 : f32
    %176 = vector.broadcast %cst_59 : f32 to vector<4x1xf32>
    %177 = arith.addf %175, %176 : vector<4x1xf32>
    %178 = math.rsqrt %177 : vector<4x1xf32>
    %179 = arith.mulf %158, %161 : vector<4x1xf32>
    %180 = arith.mulf %179, %161 : vector<4x1xf32>
    %cst_60 = arith.constant 0.000000e+00 : f32
    %181 = vector.broadcast %cst_60 : f32 to vector<4x1xf32>
    %182 = arith.addf %181, %180 : vector<4x1xf32>
    %183 = arith.mulf %175, %178 : vector<4x1xf32>
    %184 = arith.mulf %183, %178 : vector<4x1xf32>
    %185 = arith.addf %182, %184 : vector<4x1xf32>
    %cst_61 = arith.constant 5.000000e-01 : f32
    %186 = vector.broadcast %cst_61 : f32 to vector<4x1xf32>
    %187 = arith.mulf %185, %186 : vector<4x1xf32>
    %cst_62 = arith.constant 9.99999974E-6 : f32
    %188 = vector.broadcast %cst_62 : f32 to vector<4x1xf32>
    %189 = arith.addf %187, %188 : vector<4x1xf32>
    %190 = math.rsqrt %189 : vector<4x1xf32>
    %191 = arith.mulf %190, %142 : vector<4x1xf32>
    %192 = arith.mulf %161, %191 : vector<4x1xf32>
    %193 = arith.mulf %149, %192 : vector<4x1xf32>
    %194 = arith.subf %143, %193 : vector<4x1xf32>
    %195 = vector.broadcast %192 : vector<4x1xf32> to vector<4x128xf32>
    %196 = arith.mulf %145, %195 : vector<4x128xf32>
    %197 = vector.broadcast %194 : vector<4x1xf32> to vector<4x128xf32>
    %198 = arith.addf %196, %197 : vector<4x128xf32>
    %cst_63 = arith.constant 0.000000e+00 : f32
    %199 = vector.broadcast %cst_63 : f32 to vector<4x128xf32>
    %200 = arith.maximumf %198, %199 : vector<4x128xf32>
    %201 = arith.mulf %178, %191 : vector<4x1xf32>
    %202 = arith.mulf %166, %201 : vector<4x1xf32>
    %203 = arith.subf %143, %202 : vector<4x1xf32>
    %204 = vector.broadcast %201 : vector<4x1xf32> to vector<4x128xf32>
    %205 = arith.mulf %162, %204 : vector<4x128xf32>
    %206 = vector.broadcast %203 : vector<4x1xf32> to vector<4x128xf32>
    %207 = arith.addf %205, %206 : vector<4x128xf32>
    %cst_64 = arith.constant 0.000000e+00 : f32
    %208 = vector.broadcast %cst_64 : f32 to vector<4x128xf32>
    %209 = arith.maximumf %207, %208 : vector<4x128xf32>
    %c88 = arith.constant 88 : index
    %c0_65 = arith.constant 0 : index
    %210 = vector.load %arg1[%c88, %c0_65] : memref<96x128xf32, #tpu.memory_space<vmem>>, vector<4x1xf32>
    %c88_66 = arith.constant 88 : index
    %c1 = arith.constant 1 : index
    %211 = vector.load %arg1[%c88_66, %c1] : memref<96x128xf32, #tpu.memory_space<vmem>>, vector<1x1xf32>
    %212 = vector.broadcast %210 : vector<4x1xf32> to vector<4x128xf32>
    %213 = arith.mulf %200, %212 : vector<4x128xf32>
    %cst_67 = arith.constant dense<0.000000e+00> : vector<128xf32>
    %214 = vector.multi_reduction <add>, %213, %cst_67 [0] : vector<4x128xf32> to vector<128xf32>
    %215 = vector.shape_cast %214 : vector<128xf32> to vector<1x128xf32>
    %216 = vector.broadcast %211 : vector<1x1xf32> to vector<1x128xf32>
    %217 = arith.addf %215, %216 : vector<1x128xf32>
    %c0_68 = arith.constant 0 : index
    %c0_69 = arith.constant 0 : index
    %218 = vector.load %arg2[%c0_68, %c0_69] : memref<1x256xf32, #tpu.memory_space<vmem>>, vector<1x128xf32>
    tpu.vector_store %arg2[%c0_68, %c0_69], %217 {strides = array<i32>} : memref<1x256xf32, #tpu.memory_space<vmem>>, vector<1x128xf32>,
    %219 = vector.broadcast %210 : vector<4x1xf32> to vector<4x128xf32>
    %220 = arith.mulf %209, %219 : vector<4x128xf32>
    %cst_70 = arith.constant dense<0.000000e+00> : vector<128xf32>
    %221 = vector.multi_reduction <add>, %220, %cst_70 [0] : vector<4x128xf32> to vector<128xf32>
    %222 = vector.shape_cast %221 : vector<128xf32> to vector<1x128xf32>
    %223 = vector.broadcast %211 : vector<1x1xf32> to vector<1x128xf32>
    %224 = arith.addf %222, %223 : vector<1x128xf32>
    %c0_71 = arith.constant 0 : index
    %c128 = arith.constant 128 : index
    %225 = vector.load %arg2[%c0_71, %c128] : memref<1x256xf32, #tpu.memory_space<vmem>>, vector<1x128xf32>
    tpu.vector_store %arg2[%c0_71, %c128], %224 {strides = array<i32>} : memref<1x256xf32, #tpu.memory_space<vmem>>, vector<1x128xf32>,
    return
  }
}

</mosaic_0001>

<llo_original>
// kernel: inliner_predictor.1
$region0: #{inliner_predictor.1}
  #allocation0 [shape = 'u32[]', space=smem, size = 0x4, offset = 0x4, fixed_abs, tag = 'smem constant byte address 0x4 - core index']
  #allocation1 [shape = 'u32[144,128]{1,0:T(1,128)}', space=vmem, size = 0x12000, scoped, tag = 'internal scratch']
  %s0 = inlined_call_operand.vmem [shape: f32[4,256], index: 0, kind: input, shape index: {}]
  %s1 = inlined_call_operand.vmem [shape: f32[96,128], index: 1, kind: input, shape index: {}]
  %s2 = inlined_call_operand.hbm [shape: f32[1,256], index: 2, kind: output, shape index: {}]
  %s3 = sld [smem:[#allocation0]]
  $region18: #{inliner_predictor.1} parent=0
    _
  %s5 = ssub.s32 1, %s3
  %s6 = scalar_select 0, %s5, %s3
  $region1: #{inliner_predictor.1} parent=0
    #allocation2 [shape = 'u8[1024]{0}', space=vmem, size = 0x400, scoped, tag = 'output window, operand 0, single buffered']
    #allocation3 [shape = 's32[1]{0}', space=sflag, size = 0x4, scoped, tag = 'scoped memory for inliner_predictor.1']
    %7 = vsyncpa [#allocation3], 0
    // Predicated region
    $region2: #{inliner_predictor.1} parent=1 // pred_check
      _
    $region3: #{inliner_predictor.1} parent=1 // pred_check_branch
      %9 = sbr.rel (0) target = $region5
    $region4: #{inliner_predictor.1} parent=1 // pred_region
      _
    $region5: #{inliner_predictor.1} parent=1 // pred_fallthru
      _
    // Predicated region
    $region6: #{inliner_predictor.1} parent=1 // pred_check
      _
    $region7: #{inliner_predictor.1} parent=1 // pred_check_branch
      %11 = sbr.rel (0) target = $region9
    $region8: #{inliner_predictor.1} parent=1 // pred_region
      _
    $region9: #{inliner_predictor.1} parent=1 // pred_fallthru
      _
    %v12 = vld [vmem:[%s0] sm:$0xff]
    %v13 = vld [vmem:[%s1] sm:$0xff]
    %v14 = vld [vmem:[%s1 + $0x8] sm:$0xff]
    %v15 = vld [vmem:[%s1 + $0x10] sm:$0xff]
    %v16 = vld [vmem:[%s1 + $0x18] sm:$0xff]
    %v17 = vld [vmem:[%s1 + $0x20] sm:$0xff]
    %v18 = vld [vmem:[%s1 + $0x28] sm:$0xff]
    %v19 = vld [vmem:[%s1 + $0x30] sm:$0xff]
    %v20 = vld [vmem:[%s1 + $0x38] sm:$0xff]
    %v22 = vcombine.high %v12, %v12
    %vm23 = vcmask 31744
    %v25 = vsel %vm23, %v13, 0
    %v28 = vsel %vm23, %v14, 0
    %v31 = vsel %vm23, %v15, 0
    %v34 = vsel %vm23, %v16, 0
    %v37 = vsel %vm23, %v17, 0
    %v40 = vsel %vm23, %v18, 0
    %v43 = vsel %vm23, %v19, 0
    %v46 = vsel %vm23, %v20, 0
    %vm48 = vcmask 1043456
    %v49 = vsel %vm48, %v12, 0
    %v51 = vsel %vm48, %v22, 0
    %53 = vmatprep.subr.mxu0 %v51
    %54 = vmatpush1.msra.mxu0 %v49
    %55 = vmatprep.subr.mxu0 0.0
    %56 = vmatpush1.msra.mxu0 0.0
    %57 = vmatprep.subr.mxu0 0.0
    %58 = vmatpush1.msra.mxu0 0.0
    %59 = vmatprep.subr.mxu0 0.0
    %60 = vmatpush1.msra.mxu0 0.0
    %61 = vmatprep.subr.mxu0 0.0
    %62 = vmatpush1.msra.mxu0 0.0
    %63 = vmatprep.subr.mxu0 0.0
    %64 = vmatpush1.msra.mxu0 0.0
    %65 = vmatprep.subr.mxu0 0.0
    %66 = vmatpush1.msra.mxu0 0.0
    %67 = vmatprep.subr.mxu0 0.0
    %68 = vmatpush1.msra.mxu0 0.0
    %69 = vmatprep.subr.mxu0 0.0
    %70 = vmatpush1.msra.mxu0 0.0
    %71 = vmatprep.subr.mxu0 0.0
    %72 = vmatpush1.msra.mxu0 0.0
    %73 = vmatprep.subr.mxu0 0.0
    %74 = vmatpush1.msra.mxu0 0.0
    %75 = vmatprep.subr.mxu0 0.0
    %76 = vmatpush1.msra.mxu0 0.0
    %77 = vmatprep.subr.mxu0 0.0
    %78 = vmatpush1.msra.mxu0 0.0
    %79 = vmatprep.subr.mxu0 0.0
    %80 = vmatpush1.msra.mxu0 0.0
    %81 = vmatprep.subr.mxu0 0.0
    %82 = vmatpush1.msra.mxu0 0.0
    %83 = vmatprep.subr.mxu0 0.0
    %84 = vmatpush1.msra.mxu0 0.0
    %85 = vmatprep.subr.mxu0 0.0
    %86 = vmatpush1.msra.mxu0 0.0
    %87 = vmatprep.subr.mxu0 0.0
    %88 = vmatpush1.msra.mxu0 0.0
    %89 = vmatprep.subr.mxu0 0.0
    %90 = vmatpush1.msra.mxu0 0.0
    %91 = vmatprep.subr.mxu0 0.0
    %92 = vmatpush1.msra.mxu0 0.0
    %93 = vmatprep.subr.mxu0 0.0
    %94 = vmatpush1.msra.mxu0 0.0
    %95 = vmatprep.subr.mxu0 0.0
    %96 = vmatpush1.msra.mxu0 0.0
    %97 = vmatprep.subr.mxu0 0.0
    %98 = vmatpush1.msra.mxu0 0.0
    %99 = vmatprep.subr.mxu0 0.0
    %100 = vmatpush1.msra.mxu0 0.0
    %101 = vmatprep.subr.mxu0 0.0
    %102 = vmatpush1.msra.mxu0 0.0
    %103 = vmatprep.subr.mxu0 0.0
    %104 = vmatpush1.msra.mxu0 0.0
    %105 = vmatprep.subr.mxu0 0.0
    %106 = vmatpush1.msra.mxu0 0.0
    %107 = vmatprep.subr.mxu0 0.0
    %108 = vmatpush1.msra.mxu0 0.0
    %109 = vmatprep.subr.mxu0 0.0
    %110 = vmatpush1.msra.mxu0 0.0
    %111 = vmatprep.subr.mxu0 0.0
    %112 = vmatpush1.msra.mxu0 0.0
    %113 = vmatprep.subr.mxu0 0.0
    %114 = vmatpush1.msra.mxu0 0.0
    %115 = vmatprep.subr.mxu0 0.0
    %116 = vmatpush1.msra.mxu0 0.0
    %117 = vmatprep.mubr.f32.mxu0 0.0
    %118 = vmatmul.mubr.f32.gmra.mrb[0].mxu0 %v25
    %v119 = vpop.f32.mrb[0].mxu0
    %v120 = vadd.f32 0.0, %v119
    %v121 = vpop.f32.mrb[0].mxu0
    %v122 = vadd.f32 0.0, %v121
    %123 = vmatprep.mubr.f32.mxu0 0.0
    %124 = vmatmul.mubr.f32.gmra.mrb[0].mxu0 %v28
    %v125 = vpop.f32.mrb[0].mxu0
    %v126 = vadd.f32 0.0, %v125
    %v127 = vpop.f32.mrb[0].mxu0
    %v128 = vadd.f32 0.0, %v127
    %129 = vmatprep.mubr.f32.mxu0 0.0
    %130 = vmatmul.mubr.f32.gmra.mrb[0].mxu0 %v31
    %v131 = vpop.f32.mrb[0].mxu0
    %v132 = vadd.f32 0.0, %v131
    %v133 = vpop.f32.mrb[0].mxu0
    %v134 = vadd.f32 0.0, %v133
    %135 = vmatprep.mubr.f32.mxu0 0.0
    %136 = vmatmul.mubr.f32.gmra.mrb[0].mxu0 %v34
    %v137 = vpop.f32.mrb[0].mxu0
    %v138 = vadd.f32 0.0, %v137
    %v139 = vpop.f32.mrb[0].mxu0
    %v140 = vadd.f32 0.0, %v139
    %141 = vmatprep.mubr.f32.mxu0 0.0
    %142 = vmatmul.mubr.f32.gmra.mrb[0].mxu0 %v37
    %v143 = vpop.f32.mrb[0].mxu0
    %v144 = vadd.f32 0.0, %v143
    %v145 = vpop.f32.mrb[0].mxu0
    %v146 = vadd.f32 0.0, %v145
    %147 = vmatprep.mubr.f32.mxu0 0.0
    %148 = vmatmul.mubr.f32.gmra.mrb[0].mxu0 %v40
    %v149 = vpop.f32.mrb[0].mxu0
    %v150 = vadd.f32 0.0, %v149
    %v151 = vpop.f32.mrb[0].mxu0
    %v152 = vadd.f32 0.0, %v151
    %153 = vmatprep.mubr.f32.mxu0 0.0
    %154 = vmatmul.mubr.f32.gmra.mrb[0].mxu0 %v43
    %v155 = vpop.f32.mrb[0].mxu0
    %v156 = vadd.f32 0.0, %v155
    %v157 = vpop.f32.mrb[0].mxu0
    %v158 = vadd.f32 0.0, %v157
    %159 = vmatprep.mubr.f32.mxu0 0.0
    %160 = vmatmul.mubr.f32.gmra.mrb[0].mxu0 %v46
    %v161 = vpop.f32.mrb[0].mxu0
    %v162 = vadd.f32 0.0, %v161
    %v163 = vpop.f32.mrb[0].mxu0
    %v164 = vadd.f32 0.0, %v163
    %165 = vdwg.mxu0
    %166 = vadd.xlane.f32.xlu0 %v120
    %v167 = vpop.xlane.xlu0 %166
    %168 = vadd.xlane.f32.xlu0 %v126
    %v169 = vpop.xlane.xlu0 %168
    %170 = vadd.xlane.f32.xlu0 %v132
    %v171 = vpop.xlane.xlu0 %170
    %172 = vadd.xlane.f32.xlu0 %v138
    %v173 = vpop.xlane.xlu0 %172
    %174 = vadd.xlane.f32.xlu0 %v144
    %v175 = vpop.xlane.xlu0 %174
    %176 = vadd.xlane.f32.xlu0 %v150
    %v177 = vpop.xlane.xlu0 %176
    %178 = vadd.xlane.f32.xlu0 %v156
    %v179 = vpop.xlane.xlu0 %178
    %180 = vadd.xlane.f32.xlu0 %v162
    %v181 = vpop.xlane.xlu0 %180
    %v182 = vrcp.pop 128.0
    %v183 = vmul.f32 %v167, %v182
    %v184 = vmul.f32 %v169, %v182
    %v185 = vmul.f32 %v171, %v182
    %v186 = vmul.f32 %v173, %v182
    %v187 = vmul.f32 %v175, %v182
    %v188 = vmul.f32 %v177, %v182
    %v189 = vmul.f32 %v179, %v182
    %v190 = vmul.f32 %v181, %v182
    %v191 = vmul.f32 %v120, %v120
    %v192 = vmul.f32 %v126, %v126
    %v193 = vmul.f32 %v132, %v132
    %v194 = vmul.f32 %v138, %v138
    %v195 = vmul.f32 %v144, %v144
    %v196 = vmul.f32 %v150, %v150
    %v197 = vmul.f32 %v156, %v156
    %v198 = vmul.f32 %v162, %v162
    %199 = vadd.xlane.f32.xlu0 %v191
    %v200 = vpop.xlane.xlu0 %199
    %201 = vadd.xlane.f32.xlu0 %v192
    %v202 = vpop.xlane.xlu0 %201
    %203 = vadd.xlane.f32.xlu0 %v193
    %v204 = vpop.xlane.xlu0 %203
    %205 = vadd.xlane.f32.xlu0 %v194
    %v206 = vpop.xlane.xlu0 %205
    %207 = vadd.xlane.f32.xlu0 %v195
    %v208 = vpop.xlane.xlu0 %207
    %209 = vadd.xlane.f32.xlu0 %v196
    %v210 = vpop.xlane.xlu0 %209
    %211 = vadd.xlane.f32.xlu0 %v197
    %v212 = vpop.xlane.xlu0 %211
    %213 = vadd.xlane.f32.xlu0 %v198
    %v214 = vpop.xlane.xlu0 %213
    %v215 = vmul.f32 %v200, %v182
    %v216 = vmul.f32 %v202, %v182
    %v217 = vmul.f32 %v204, %v182
    %v218 = vmul.f32 %v206, %v182
    %v219 = vmul.f32 %v208, %v182
    %v220 = vmul.f32 %v210, %v182
    %v221 = vmul.f32 %v212, %v182
    %v222 = vmul.f32 %v214, %v182
    %v223 = vmul.f32 %v183, %v183
    %v224 = vmul.f32 %v184, %v184
    %v225 = vmul.f32 %v185, %v185
    %v226 = vmul.f32 %v186, %v186
    %v227 = vmul.f32 %v187, %v187
    %v228 = vmul.f32 %v188, %v188
    %v229 = vmul.f32 %v189, %v189
    %v230 = vmul.f32 %v190, %v190
    %v231 = vsub.f32 %v215, %v223
    %v232 = vsub.f32 %v216, %v224
    %v233 = vsub.f32 %v217, %v225
    %v234 = vsub.f32 %v218, %v226
    %v235 = vsub.f32 %v219, %v227
    %v236 = vsub.f32 %v220, %v228
    %v237 = vsub.f32 %v221, %v229
    %v238 = vsub.f32 %v222, %v230
    %v239 = vmax.f32 %v231, 0.0
    %v240 = vmax.f32 %v232, 0.0
    %v241 = vmax.f32 %v233, 0.0
    %v242 = vmax.f32 %v234, 0.0
    %v243 = vmax.f32 %v235, 0.0
    %v244 = vmax.f32 %v236, 0.0
    %v245 = vmax.f32 %v237, 0.0
    %v246 = vmax.f32 %v238, 0.0
    %v247 = vadd.f32 %v239, 0.001
    %v248 = vadd.f32 %v240, 0.001
    %v249 = vadd.f32 %v241, 0.001
    %v250 = vadd.f32 %v242, 0.001
    %v251 = vadd.f32 %v243, 0.001
    %v252 = vadd.f32 %v244, 0.001
    %v253 = vadd.f32 %v245, 0.001
    %v254 = vadd.f32 %v246, 0.001
    %v255 = vrsqrt.pop %v247
    %v256 = vrsqrt.pop %v248
    %v257 = vrsqrt.pop %v249
    %v258 = vrsqrt.pop %v250
    %v259 = vrsqrt.pop %v251
    %v260 = vrsqrt.pop %v252
    %v261 = vrsqrt.pop %v253
    %v262 = vrsqrt.pop %v254
    %263 = vadd.xlane.f32.xlu0 %v122
    %v264 = vpop.xlane.xlu0 %263
    %265 = vadd.xlane.f32.xlu0 %v128
    %v266 = vpop.xlane.xlu0 %265
    %267 = vadd.xlane.f32.xlu0 %v134
    %v268 = vpop.xlane.xlu0 %267
    %269 = vadd.xlane.f32.xlu0 %v140
    %v270 = vpop.xlane.xlu0 %269
    %271 = vadd.xlane.f32.xlu0 %v146
    %v272 = vpop.xlane.xlu0 %271
    %273 = vadd.xlane.f32.xlu0 %v152
    %v274 = vpop.xlane.xlu0 %273
    %275 = vadd.xlane.f32.xlu0 %v158
    %v276 = vpop.xlane.xlu0 %275
    %277 = vadd.xlane.f32.xlu0 %v164
    %v278 = vpop.xlane.xlu0 %277
    %v279 = vmul.f32 %v264, %v182
    %v280 = vmul.f32 %v266, %v182
    %v281 = vmul.f32 %v268, %v182
    %v282 = vmul.f32 %v270, %v182
    %v283 = vmul.f32 %v272, %v182
    %v284 = vmul.f32 %v274, %v182
    %v285 = vmul.f32 %v276, %v182
    %v286 = vmul.f32 %v278, %v182
    %v287 = vmul.f32 %v122, %v122
    %v288 = vmul.f32 %v128, %v128
    %v289 = vmul.f32 %v134, %v134
    %v290 = vmul.f32 %v140, %v140
    %v291 = vmul.f32 %v146, %v146
    %v292 = vmul.f32 %v152, %v152
    %v293 = vmul.f32 %v158, %v158
    %v294 = vmul.f32 %v164, %v164
    %295 = vadd.xlane.f32.xlu0 %v287
    %v296 = vpop.xlane.xlu0 %295
    %297 = vadd.xlane.f32.xlu0 %v288
    %v298 = vpop.xlane.xlu0 %297
    %299 = vadd.xlane.f32.xlu0 %v289
    %v300 = vpop.xlane.xlu0 %299
    %301 = vadd.xlane.f32.xlu0 %v290
    %v302 = vpop.xlane.xlu0 %301
    %303 = vadd.xlane.f32.xlu0 %v291
    %v304 = vpop.xlane.xlu0 %303
    %305 = vadd.xlane.f32.xlu0 %v292
    %v306 = vpop.xlane.xlu0 %305
    %307 = vadd.xlane.f32.xlu0 %v293
    %v308 = vpop.xlane.xlu0 %307
    %309 = vadd.xlane.f32.xlu0 %v294
    %v310 = vpop.xlane.xlu0 %309
    %v311 = vmul.f32 %v296, %v182
    %v312 = vmul.f32 %v298, %v182
    %v313 = vmul.f32 %v300, %v182
    %v314 = vmul.f32 %v302, %v182
    %v315 = vmul.f32 %v304, %v182
    %v316 = vmul.f32 %v306, %v182
    %v317 = vmul.f32 %v308, %v182
    %v318 = vmul.f32 %v310, %v182
    %v319 = vmul.f32 %v279, %v279
    %v320 = vmul.f32 %v280, %v280
    %v321 = vmul.f32 %v281, %v281
    %v322 = vmul.f32 %v282, %v282
    %v323 = vmul.f32 %v283, %v283
    %v324 = vmul.f32 %v284, %v284
    %v325 = vmul.f32 %v285, %v285
    %v326 = vmul.f32 %v286, %v286
    %v327 = vsub.f32 %v311, %v319
    %v328 = vsub.f32 %v312, %v320
    %v329 = vsub.f32 %v313, %v321
    %v330 = vsub.f32 %v314, %v322
    %v331 = vsub.f32 %v315, %v323
    %v332 = vsub.f32 %v316, %v324
    %v333 = vsub.f32 %v317, %v325
    %v334 = vsub.f32 %v318, %v326
    %v335 = vmax.f32 %v327, 0.0
    %v336 = vmax.f32 %v328, 0.0
    %v337 = vmax.f32 %v329, 0.0
    %v338 = vmax.f32 %v330, 0.0
    %v339 = vmax.f32 %v331, 0.0
    %v340 = vmax.f32 %v332, 0.0
    %v341 = vmax.f32 %v333, 0.0
    %v342 = vmax.f32 %v334, 0.0
    %v343 = vadd.f32 %v335, 0.001
    %v344 = vadd.f32 %v336, 0.001
    %v345 = vadd.f32 %v337, 0.001
    %v346 = vadd.f32 %v338, 0.001
    %v347 = vadd.f32 %v339, 0.001
    %v348 = vadd.f32 %v340, 0.001
    %v349 = vadd.f32 %v341, 0.001
    %v350 = vadd.f32 %v342, 0.001
    %v351 = vrsqrt.pop %v343
    %v352 = vrsqrt.pop %v344
    %v353 = vrsqrt.pop %v345
    %v354 = vrsqrt.pop %v346
    %v355 = vrsqrt.pop %v347
    %v356 = vrsqrt.pop %v348
    %v357 = vrsqrt.pop %v349
    %v358 = vrsqrt.pop %v350
    %v359 = vmul.f32 %v239, %v255
    %v360 = vmul.f32 %v240, %v256
    %v361 = vmul.f32 %v241, %v257
    %v362 = vmul.f32 %v242, %v258
    %v363 = vmul.f32 %v243, %v259
    %v364 = vmul.f32 %v244, %v260
    %v365 = vmul.f32 %v245, %v261
    %v366 = vmul.f32 %v246, %v262
    %v367 = vmul.f32 %v359, %v255
    %v368 = vmul.f32 %v360, %v256
    %v369 = vmul.f32 %v361, %v257
    %v370 = vmul.f32 %v362, %v258
    %v371 = vmul.f32 %v363, %v259
    %v372 = vmul.f32 %v364, %v260
    %v373 = vmul.f32 %v365, %v261
    %v374 = vmul.f32 %v366, %v262
    %v375 = vadd.f32 %v367, 0.0
    %v376 = vadd.f32 %v368, 0.0
    %v377 = vadd.f32 %v369, 0.0
    %v378 = vadd.f32 %v370, 0.0
    %v379 = vadd.f32 %v371, 0.0
    %v380 = vadd.f32 %v372, 0.0
    %v381 = vadd.f32 %v373, 0.0
    %v382 = vadd.f32 %v374, 0.0
    %v383 = vmul.f32 %v335, %v351
    %v384 = vmul.f32 %v336, %v352
    %v385 = vmul.f32 %v337, %v353
    %v386 = vmul.f32 %v338, %v354
    %v387 = vmul.f32 %v339, %v355
    %v388 = vmul.f32 %v340, %v356
    %v389 = vmul.f32 %v341, %v357
    %v390 = vmul.f32 %v342, %v358
    %v391 = vmul.f32 %v383, %v351
    %v392 = vmul.f32 %v384, %v352
    %v393 = vmul.f32 %v385, %v353
    %v394 = vmul.f32 %v386, %v354
    %v395 = vmul.f32 %v387, %v355
    %v396 = vmul.f32 %v388, %v356
    %v397 = vmul.f32 %v389, %v357
    %v398 = vmul.f32 %v390, %v358
    %v399 = vadd.f32 %v375, %v391
    %v400 = vadd.f32 %v376, %v392
    %v401 = vadd.f32 %v377, %v393
    %v402 = vadd.f32 %v378, %v394
    %v403 = vadd.f32 %v379, %v395
    %v404 = vadd.f32 %v380, %v396
    %v405 = vadd.f32 %v381, %v397
    %v406 = vadd.f32 %v382, %v398
    %v407 = vmul.f32 %v399, 0.5
    %v408 = vmul.f32 %v400, 0.5
    %v409 = vmul.f32 %v401, 0.5
    %v410 = vmul.f32 %v402, 0.5
    %v411 = vmul.f32 %v403, 0.5
    %v412 = vmul.f32 %v404, 0.5
    %v413 = vmul.f32 %v405, 0.5
    %v414 = vmul.f32 %v406, 0.5
    %v415 = vadd.f32 %v407, 1e-05
    %v416 = vadd.f32 %v408, 1e-05
    %v417 = vadd.f32 %v409, 1e-05
    %v418 = vadd.f32 %v410, 1e-05
    %v419 = vadd.f32 %v411, 1e-05
    %v420 = vadd.f32 %v412, 1e-05
    %v421 = vadd.f32 %v413, 1e-05
    %v422 = vadd.f32 %v414, 1e-05
    %v423 = vrsqrt.pop %v415
    %v424 = vrsqrt.pop %v416
    %v425 = vrsqrt.pop %v417
    %v426 = vrsqrt.pop %v418
    %v427 = vrsqrt.pop %v419
    %v428 = vrsqrt.pop %v420
    %v429 = vrsqrt.pop %v421
    %v430 = vrsqrt.pop %v422
    %v431 = vmul.f32 %v423, %v13
    %v432 = vmul.f32 %v424, %v14
    %v433 = vmul.f32 %v425, %v15
    %v434 = vmul.f32 %v426, %v16
    %v435 = vmul.f32 %v427, %v17
    %v436 = vmul.f32 %v428, %v18
    %v437 = vmul.f32 %v429, %v19
    %v438 = vmul.f32 %v430, %v20
    %v439 = vmul.f32 %v255, %v431
    %v440 = vmul.f32 %v256, %v432
    %v441 = vmul.f32 %v257, %v433
    %v442 = vmul.f32 %v258, %v434
    %v443 = vmul.f32 %v259, %v435
    %v444 = vmul.f32 %v260, %v436
    %v445 = vmul.f32 %v261, %v437
    %v446 = vmul.f32 %v262, %v438
    %v447 = vmul.f32 %v183, %v439
    %v448 = vmul.f32 %v184, %v440
    %v449 = vmul.f32 %v185, %v441
    %v450 = vmul.f32 %v186, %v442
    %v451 = vmul.f32 %v187, %v443
    %v452 = vmul.f32 %v188, %v444
    %v453 = vmul.f32 %v189, %v445
    %v454 = vmul.f32 %v190, %v446
    %463 = vrot.lane.b32.xlu0 %v447, 1
    %v464 = vpop.permute.xlu0 %463
    %465 = vrot.lane.b32.xlu0 %v448, 1
    %v466 = vpop.permute.xlu0 %465
    %467 = vrot.lane.b32.xlu0 %v449, 1
    %v468 = vpop.permute.xlu0 %467
    %469 = vrot.lane.b32.xlu0 %v450, 1
    %v470 = vpop.permute.xlu0 %469
    %471 = vrot.lane.b32.xlu0 %v451, 1
    %v472 = vpop.permute.xlu0 %471
    %473 = vrot.lane.b32.xlu0 %v452, 1
    %v474 = vpop.permute.xlu0 %473
    %475 = vrot.lane.b32.xlu0 %v453, 1
    %v476 = vpop.permute.xlu0 %475
    %477 = vrot.lane.b32.xlu0 %v454, 1
    %v478 = vpop.permute.xlu0 %477
    %v487 = vsub.f32 %v13, %v464
    %v488 = vsub.f32 %v14, %v466
    %v489 = vsub.f32 %v15, %v468
    %v490 = vsub.f32 %v16, %v470
    %v491 = vsub.f32 %v17, %v472
    %v492 = vsub.f32 %v18, %v474
    %v493 = vsub.f32 %v19, %v476
    %v494 = vsub.f32 %v20, %v478
    %496 = vset.pattern.permute.xlu0 4
    %497 = vperm.xlu0 %496, %v439
    %v498 = vpop.permute.xlu0 %497
    %501 = vset.pattern.permute.xlu0 4
    %502 = vperm.xlu0 %501, %v440
    %v503 = vpop.permute.xlu0 %502
    %506 = vset.pattern.permute.xlu0 4
    %507 = vperm.xlu0 %506, %v441
    %v508 = vpop.permute.xlu0 %507
    %511 = vset.pattern.permute.xlu0 4
    %512 = vperm.xlu0 %511, %v442
    %v513 = vpop.permute.xlu0 %512
    %516 = vset.pattern.permute.xlu0 4
    %517 = vperm.xlu0 %516, %v443
    %v518 = vpop.permute.xlu0 %517
    %521 = vset.pattern.permute.xlu0 4
    %522 = vperm.xlu0 %521, %v444
    %v523 = vpop.permute.xlu0 %522
    %526 = vset.pattern.permute.xlu0 4
    %527 = vperm.xlu0 %526, %v445
    %v528 = vpop.permute.xlu0 %527
    %531 = vset.pattern.permute.xlu0 4
    %532 = vperm.xlu0 %531, %v446
    %v533 = vpop.permute.xlu0 %532
    %v535 = vmul.f32 %v120, %v498
    %v536 = vmul.f32 %v126, %v503
    %v537 = vmul.f32 %v132, %v508
    %v538 = vmul.f32 %v138, %v513
    %v539 = vmul.f32 %v144, %v518
    %v540 = vmul.f32 %v150, %v523
    %v541 = vmul.f32 %v156, %v528
    %v542 = vmul.f32 %v162, %v533
    %544 = vset.pattern.permute.xlu0 5
    %545 = vperm.xlu0 %544, %v487
    %v546 = vpop.permute.xlu0 %545
    %549 = vset.pattern.permute.xlu0 5
    %550 = vperm.xlu0 %549, %v488
    %v551 = vpop.permute.xlu0 %550
    %554 = vset.pattern.permute.xlu0 5
    %555 = vperm.xlu0 %554, %v489
    %v556 = vpop.permute.xlu0 %555
    %559 = vset.pattern.permute.xlu0 5
    %560 = vperm.xlu0 %559, %v490
    %v561 = vpop.permute.xlu0 %560
    %564 = vset.pattern.permute.xlu0 5
    %565 = vperm.xlu0 %564, %v491
    %v566 = vpop.permute.xlu0 %565
    %569 = vset.pattern.permute.xlu0 5
    %570 = vperm.xlu0 %569, %v492
    %v571 = vpop.permute.xlu0 %570
    %574 = vset.pattern.permute.xlu0 5
    %575 = vperm.xlu0 %574, %v493
    %v576 = vpop.permute.xlu0 %575
    %579 = vset.pattern.permute.xlu0 5
    %580 = vperm.xlu0 %579, %v494
    %v581 = vpop.permute.xlu0 %580
    %v583 = vadd.f32 %v535, %v546
    %v584 = vadd.f32 %v536, %v551
    %v585 = vadd.f32 %v537, %v556
    %v586 = vadd.f32 %v538, %v561
    %v587 = vadd.f32 %v539, %v566
    %v588 = vadd.f32 %v540, %v571
    %v589 = vadd.f32 %v541, %v576
    %v590 = vadd.f32 %v542, %v581
    %v591 = vmax.f32 %v583, 0.0
    %v592 = vmax.f32 %v584, 0.0
    %v593 = vmax.f32 %v585, 0.0
    %v594 = vmax.f32 %v586, 0.0
    %v595 = vmax.f32 %v587, 0.0
    %v596 = vmax.f32 %v588, 0.0
    %v597 = vmax.f32 %v589, 0.0
    %v598 = vmax.f32 %v590, 0.0
    %v599 = vmul.f32 %v351, %v431
    %v600 = vmul.f32 %v352, %v432
    %v601 = vmul.f32 %v353, %v433
    %v602 = vmul.f32 %v354, %v434
    %v603 = vmul.f32 %v355, %v435
    %v604 = vmul.f32 %v356, %v436
    %v605 = vmul.f32 %v357, %v437
    %v606 = vmul.f32 %v358, %v438
    %v607 = vmul.f32 %v279, %v599
    %v608 = vmul.f32 %v280, %v600
    %v609 = vmul.f32 %v281, %v601
    %v610 = vmul.f32 %v282, %v602
    %v611 = vmul.f32 %v283, %v603
    %v612 = vmul.f32 %v284, %v604
    %v613 = vmul.f32 %v285, %v605
    %v614 = vmul.f32 %v286, %v606
    %623 = vrot.lane.b32.xlu0 %v607, 1
    %v624 = vpop.permute.xlu0 %623
    %625 = vrot.lane.b32.xlu0 %v608, 1
    %v626 = vpop.permute.xlu0 %625
    %627 = vrot.lane.b32.xlu0 %v609, 1
    %v628 = vpop.permute.xlu0 %627
    %629 = vrot.lane.b32.xlu0 %v610, 1
    %v630 = vpop.permute.xlu0 %629
    %631 = vrot.lane.b32.xlu0 %v611, 1
    %v632 = vpop.permute.xlu0 %631
    %633 = vrot.lane.b32.xlu0 %v612, 1
    %v634 = vpop.permute.xlu0 %633
    %635 = vrot.lane.b32.xlu0 %v613, 1
    %v636 = vpop.permute.xlu0 %635
    %637 = vrot.lane.b32.xlu0 %v614, 1
    %v638 = vpop.permute.xlu0 %637
    %v647 = vsub.f32 %v13, %v624
    %v648 = vsub.f32 %v14, %v626
    %v649 = vsub.f32 %v15, %v628
    %v650 = vsub.f32 %v16, %v630
    %v651 = vsub.f32 %v17, %v632
    %v652 = vsub.f32 %v18, %v634
    %v653 = vsub.f32 %v19, %v636
    %v654 = vsub.f32 %v20, %v638
    %656 = vset.pattern.permute.xlu0 4
    %657 = vperm.xlu0 %656, %v599
    %v658 = vpop.permute.xlu0 %657
    %661 = vset.pattern.permute.xlu0 4
    %662 = vperm.xlu0 %661, %v600
    %v663 = vpop.permute.xlu0 %662
    %666 = vset.pattern.permute.xlu0 4
    %667 = vperm.xlu0 %666, %v601
    %v668 = vpop.permute.xlu0 %667
    %671 = vset.pattern.permute.xlu0 4
    %672 = vperm.xlu0 %671, %v602
    %v673 = vpop.permute.xlu0 %672
    %676 = vset.pattern.permute.xlu0 4
    %677 = vperm.xlu0 %676, %v603
    %v678 = vpop.permute.xlu0 %677
    %681 = vset.pattern.permute.xlu0 4
    %682 = vperm.xlu0 %681, %v604
    %v683 = vpop.permute.xlu0 %682
    %686 = vset.pattern.permute.xlu0 4
    %687 = vperm.xlu0 %686, %v605
    %v688 = vpop.permute.xlu0 %687
    %691 = vset.pattern.permute.xlu0 4
    %692 = vperm.xlu0 %691, %v606
    %v693 = vpop.permute.xlu0 %692
    %v695 = vmul.f32 %v122, %v658
    %v696 = vmul.f32 %v128, %v663
    %v697 = vmul.f32 %v134, %v668
    %v698 = vmul.f32 %v140, %v673
    %v699 = vmul.f32 %v146, %v678
    %v700 = vmul.f32 %v152, %v683
    %v701 = vmul.f32 %v158, %v688
    %v702 = vmul.f32 %v164, %v693
    %704 = vset.pattern.permute.xlu0 5
    %705 = vperm.xlu0 %704, %v647
    %v706 = vpop.permute.xlu0 %705
    %709 = vset.pattern.permute.xlu0 5
    %710 = vperm.xlu0 %709, %v648
    %v711 = vpop.permute.xlu0 %710
    %714 = vset.pattern.permute.xlu0 5
    %715 = vperm.xlu0 %714, %v649
    %v716 = vpop.permute.xlu0 %715
    %719 = vset.pattern.permute.xlu0 5
    %720 = vperm.xlu0 %719, %v650
    %v721 = vpop.permute.xlu0 %720
    %724 = vset.pattern.permute.xlu0 5
    %725 = vperm.xlu0 %724, %v651
    %v726 = vpop.permute.xlu0 %725
    %729 = vset.pattern.permute.xlu0 5
    %730 = vperm.xlu0 %729, %v652
    %v731 = vpop.permute.xlu0 %730
    %734 = vset.pattern.permute.xlu0 5
    %735 = vperm.xlu0 %734, %v653
    %v736 = vpop.permute.xlu0 %735
    %739 = vset.pattern.permute.xlu0 5
    %740 = vperm.xlu0 %739, %v654
    %v741 = vpop.permute.xlu0 %740
    %v743 = vadd.f32 %v695, %v706
    %v744 = vadd.f32 %v696, %v711
    %v745 = vadd.f32 %v697, %v716
    %v746 = vadd.f32 %v698, %v721
    %v747 = vadd.f32 %v699, %v726
    %v748 = vadd.f32 %v700, %v731
    %v749 = vadd.f32 %v701, %v736
    %v750 = vadd.f32 %v702, %v741
    %v751 = vmax.f32 %v743, 0.0
    %v752 = vmax.f32 %v744, 0.0
    %v753 = vmax.f32 %v745, 0.0
    %v754 = vmax.f32 %v746, 0.0
    %v755 = vmax.f32 %v747, 0.0
    %v756 = vmax.f32 %v748, 0.0
    %v757 = vmax.f32 %v749, 0.0
    %v758 = vmax.f32 %v750, 0.0
    %v759 = vld [vmem:[%s1 + $0x40] sm:$0xff]
    %v760 = vld [vmem:[%s1 + $0x48] sm:$0xff]
    %vm761 = vcmask 523264
    %v763 = vsel %vm761, %v759, 0
    %v766 = vsel %vm761, %v760, 0
    %768 = vmatprep.subr.mxu0 %v751
    %769 = vmatpush1.msra.mxu0 %v591
    %770 = vmatprep.subr.mxu0 %v752
    %771 = vmatpush1.msra.mxu0 %v592
    %772 = vmatprep.subr.mxu0 %v753
    %773 = vmatpush1.msra.mxu0 %v593
    %774 = vmatprep.subr.mxu0 %v754
    %775 = vmatpush1.msra.mxu0 %v594
    %776 = vmatprep.subr.mxu0 %v755
    %777 = vmatpush1.msra.mxu0 %v595
    %778 = vmatprep.subr.mxu0 %v756
    %779 = vmatpush1.msra.mxu0 %v596
    %780 = vmatprep.subr.mxu0 %v757
    %781 = vmatpush1.msra.mxu0 %v597
    %782 = vmatprep.subr.mxu0 %v758
    %783 = vmatpush1.msra.mxu0 %v598
    %784 = vmatprep.subr.mxu0 0.0
    %785 = vmatpush1.msra.mxu0 0.0
    %786 = vmatprep.subr.mxu0 0.0
    %787 = vmatpush1.msra.mxu0 0.0
    %788 = vmatprep.subr.mxu0 0.0
    %789 = vmatpush1.msra.mxu0 0.0
    %790 = vmatprep.subr.mxu0 0.0
    %791 = vmatpush1.msra.mxu0 0.0
    %792 = vmatprep.subr.mxu0 0.0
    %793 = vmatpush1.msra.mxu0 0.0
    %794 = vmatprep.subr.mxu0 0.0
    %795 = vmatpush1.msra.mxu0 0.0
    %796 = vmatprep.subr.mxu0 0.0
    %797 = vmatpush1.msra.mxu0 0.0
    %798 = vmatprep.subr.mxu0 0.0
    %799 = vmatpush1.msra.mxu0 0.0
    %800 = vmatprep.subr.mxu0 0.0
    %801 = vmatpush1.msra.mxu0 0.0
    %802 = vmatprep.subr.mxu0 0.0
    %803 = vmatpush1.msra.mxu0 0.0
    %804 = vmatprep.subr.mxu0 0.0
    %805 = vmatpush1.msra.mxu0 0.0
    %806 = vmatprep.subr.mxu0 0.0
    %807 = vmatpush1.msra.mxu0 0.0
    %808 = vmatprep.subr.mxu0 0.0
    %809 = vmatpush1.msra.mxu0 0.0
    %810 = vmatprep.subr.mxu0 0.0
    %811 = vmatpush1.msra.mxu0 0.0
    %812 = vmatprep.subr.mxu0 0.0
    %813 = vmatpush1.msra.mxu0 0.0
    %814 = vmatprep.subr.mxu0 0.0
    %815 = vmatpush1.msra.mxu0 0.0
    %816 = vmatprep.subr.mxu0 0.0
    %817 = vmatpush1.msra.mxu0 0.0
    %818 = vmatprep.subr.mxu0 0.0
    %819 = vmatpush1.msra.mxu0 0.0
    %820 = vmatprep.subr.mxu0 0.0
    %821 = vmatpush1.msra.mxu0 0.0
    %822 = vmatprep.subr.mxu0 0.0
    %823 = vmatpush1.msra.mxu0 0.0
    %824 = vmatprep.subr.mxu0 0.0
    %825 = vmatpush1.msra.mxu0 0.0
    %826 = vmatprep.subr.mxu0 0.0
    %827 = vmatpush1.msra.mxu0 0.0
    %828 = vmatprep.subr.mxu0 0.0
    %829 = vmatpush1.msra.mxu0 0.0
    %830 = vmatprep.subr.mxu0 0.0
    %831 = vmatpush1.msra.mxu0 0.0
    %832 = vmatprep.mubr.f32.mxu0 0.0
    %833 = vmatmul.mubr.f32.gmra.mrb[0].mxu0 %v763
    %v834 = vpop.f32.mrb[0].mxu0
    %v835 = vadd.f32 0.0, %v834
    %v836 = vpop.f32.mrb[0].mxu0
    %v837 = vadd.f32 0.0, %v836
    %838 = vmatprep.mubr.f32.mxu0 0.0
    %839 = vmatmul.mubr.f32.gmra.mrb[0].mxu0 %v766
    %v840 = vpop.f32.mrb[0].mxu0
    %v841 = vadd.f32 0.0, %v840
    %v842 = vpop.f32.mrb[0].mxu0
    %v843 = vadd.f32 0.0, %v842
    %844 = vdwg.mxu0
    %845 = vadd.xlane.f32.xlu0 %v835
    %v846 = vpop.xlane.xlu0 %845
    %847 = vadd.xlane.f32.xlu0 %v841
    %v848 = vpop.xlane.xlu0 %847
    %v849 = vmul.f32 %v846, %v182
    %v850 = vmul.f32 %v848, %v182
    %v851 = vmul.f32 %v835, %v835
    %v852 = vmul.f32 %v841, %v841
    %853 = vadd.xlane.f32.xlu0 %v851
    %v854 = vpop.xlane.xlu0 %853
    %855 = vadd.xlane.f32.xlu0 %v852
    %v856 = vpop.xlane.xlu0 %855
    %v857 = vmul.f32 %v854, %v182
    %v858 = vmul.f32 %v856, %v182
    %v859 = vmul.f32 %v849, %v849
    %v860 = vmul.f32 %v850, %v850
    %v861 = vsub.f32 %v857, %v859
    %v862 = vsub.f32 %v858, %v860
    %v863 = vmax.f32 %v861, 0.0
    %v864 = vmax.f32 %v862, 0.0
    %v865 = vadd.f32 %v863, 0.001
    %v866 = vadd.f32 %v864, 0.001
    %v867 = vrsqrt.pop %v865
    %v868 = vrsqrt.pop %v866
    %869 = vadd.xlane.f32.xlu0 %v837
    %v870 = vpop.xlane.xlu0 %869
    %871 = vadd.xlane.f32.xlu0 %v843
    %v872 = vpop.xlane.xlu0 %871
    %v873 = vmul.f32 %v870, %v182
    %v874 = vmul.f32 %v872, %v182
    %v875 = vmul.f32 %v837, %v837
    %v876 = vmul.f32 %v843, %v843
    %877 = vadd.xlane.f32.xlu0 %v875
    %v878 = vpop.xlane.xlu0 %877
    %879 = vadd.xlane.f32.xlu0 %v876
    %v880 = vpop.xlane.xlu0 %879
    %v881 = vmul.f32 %v878, %v182
    %v882 = vmul.f32 %v880, %v182
    %v883 = vmul.f32 %v873, %v873
    %v884 = vmul.f32 %v874, %v874
    %v885 = vsub.f32 %v881, %v883
    %v886 = vsub.f32 %v882, %v884
    %v887 = vmax.f32 %v885, 0.0
    %v888 = vmax.f32 %v886, 0.0
    %v889 = vadd.f32 %v887, 0.001
    %v890 = vadd.f32 %v888, 0.001
    %v891 = vrsqrt.pop %v889
    %v892 = vrsqrt.pop %v890
    %v893 = vmul.f32 %v863, %v867
    %v894 = vmul.f32 %v864, %v868
    %v895 = vmul.f32 %v893, %v867
    %v896 = vmul.f32 %v894, %v868
    %v897 = vadd.f32 %v895, 0.0
    %v898 = vadd.f32 %v896, 0.0
    %v899 = vmul.f32 %v887, %v891
    %v900 = vmul.f32 %v888, %v892
    %v901 = vmul.f32 %v899, %v891
    %v902 = vmul.f32 %v900, %v892
    %v903 = vadd.f32 %v897, %v901
    %v904 = vadd.f32 %v898, %v902
    %v905 = vmul.f32 %v903, 0.5
    %v906 = vmul.f32 %v904, 0.5
    %v907 = vadd.f32 %v905, 1e-05
    %v908 = vadd.f32 %v906, 1e-05
    %v909 = vrsqrt.pop %v907
    %v910 = vrsqrt.pop %v908
    %v911 = vmul.f32 %v909, %v759
    %v912 = vmul.f32 %v910, %v760
    %v913 = vmul.f32 %v867, %v911
    %v914 = vmul.f32 %v868, %v912
    %v915 = vmul.f32 %v849, %v913
    %v916 = vmul.f32 %v850, %v914
    %919 = vrot.lane.b32.xlu0 %v915, 1
    %v920 = vpop.permute.xlu0 %919
    %921 = vrot.lane.b32.xlu0 %v916, 1
    %v922 = vpop.permute.xlu0 %921
    %v925 = vsub.f32 %v759, %v920
    %v926 = vsub.f32 %v760, %v922
    %928 = vset.pattern.permute.xlu0 64
    %929 = vperm.xlu0 %928, %v913
    %v930 = vpop.permute.xlu0 %929
    %933 = vset.pattern.permute.xlu0 64
    %934 = vperm.xlu0 %933, %v914
    %v935 = vpop.permute.xlu0 %934
    %v937 = vmul.f32 %v835, %v930
    %v938 = vmul.f32 %v841, %v935
    %940 = vset.pattern.permute.xlu0 65
    %941 = vperm.xlu0 %940, %v925
    %v942 = vpop.permute.xlu0 %941
    %945 = vset.pattern.permute.xlu0 65
    %946 = vperm.xlu0 %945, %v926
    %v947 = vpop.permute.xlu0 %946
    %v949 = vadd.f32 %v937, %v942
    %v950 = vadd.f32 %v938, %v947
    %v951 = vmax.f32 %v949, 0.0
    %v952 = vmax.f32 %v950, 0.0
    %v953 = vmul.f32 %v891, %v911
    %v954 = vmul.f32 %v892, %v912
    %v955 = vmul.f32 %v873, %v953
    %v956 = vmul.f32 %v874, %v954
    %959 = vrot.lane.b32.xlu0 %v955, 1
    %v960 = vpop.permute.xlu0 %959
    %961 = vrot.lane.b32.xlu0 %v956, 1
    %v962 = vpop.permute.xlu0 %961
    %v965 = vsub.f32 %v759, %v960
    %v966 = vsub.f32 %v760, %v962
    %968 = vset.pattern.permute.xlu0 64
    %969 = vperm.xlu0 %968, %v953
    %v970 = vpop.permute.xlu0 %969
    %973 = vset.pattern.permute.xlu0 64
    %974 = vperm.xlu0 %973, %v954
    %v975 = vpop.permute.xlu0 %974
    %v977 = vmul.f32 %v837, %v970
    %v978 = vmul.f32 %v843, %v975
    %980 = vset.pattern.permute.xlu0 65
    %981 = vperm.xlu0 %980, %v965
    %v982 = vpop.permute.xlu0 %981
    %985 = vset.pattern.permute.xlu0 65
    %986 = vperm.xlu0 %985, %v966
    %v987 = vpop.permute.xlu0 %986
    %v989 = vadd.f32 %v977, %v982
    %v990 = vadd.f32 %v978, %v987
    %v991 = vmax.f32 %v989, 0.0
    %v992 = vmax.f32 %v990, 0.0
    %v993 = vld [vmem:[%s1 + $0x50] sm:$0xf]
    %vm994 = vcmask 130048
    %v996 = vsel %vm994, %v993, 0
    %998 = vmatprep.subr.mxu0 %v991
    %999 = vmatpush1.msra.mxu0 %v951
    %1000 = vmatprep.subr.mxu0 %v992
    %1001 = vmatpush1.msra.mxu0 %v952
    %1002 = vmatprep.subr.mxu0 0.0
    %1003 = vmatpush1.msra.mxu0 0.0
    %1004 = vmatprep.subr.mxu0 0.0
    %1005 = vmatpush1.msra.mxu0 0.0
    %1006 = vmatprep.subr.mxu0 0.0
    %1007 = vmatpush1.msra.mxu0 0.0
    %1008 = vmatprep.subr.mxu0 0.0
    %1009 = vmatpush1.msra.mxu0 0.0
    %1010 = vmatprep.subr.mxu0 0.0
    %1011 = vmatpush1.msra.mxu0 0.0
    %1012 = vmatprep.subr.mxu0 0.0
    %1013 = vmatpush1.msra.mxu0 0.0
    %1014 = vmatprep.subr.mxu0 0.0
    %1015 = vmatpush1.msra.mxu0 0.0
    %1016 = vmatprep.subr.mxu0 0.0
    %1017 = vmatpush1.msra.mxu0 0.0
    %1018 = vmatprep.subr.mxu0 0.0
    %1019 = vmatpush1.msra.mxu0 0.0
    %1020 = vmatprep.subr.mxu0 0.0
    %1021 = vmatpush1.msra.mxu0 0.0
    %1022 = vmatprep.subr.mxu0 0.0
    %1023 = vmatpush1.msra.mxu0 0.0
    %1024 = vmatprep.subr.mxu0 0.0
    %1025 = vmatpush1.msra.mxu0 0.0
    %1026 = vmatprep.subr.mxu0 0.0
    %1027 = vmatpush1.msra.mxu0 0.0
    %1028 = vmatprep.subr.mxu0 0.0
    %1029 = vmatpush1.msra.mxu0 0.0
    %1030 = vmatprep.subr.mxu0 0.0
    %1031 = vmatpush1.msra.mxu0 0.0
    %1032 = vmatprep.subr.mxu0 0.0
    %1033 = vmatpush1.msra.mxu0 0.0
    %1034 = vmatprep.subr.mxu0 0.0
    %1035 = vmatpush1.msra.mxu0 0.0
    %1036 = vmatprep.subr.mxu0 0.0
    %1037 = vmatpush1.msra.mxu0 0.0
    %1038 = vmatprep.subr.mxu0 0.0
    %1039 = vmatpush1.msra.mxu0 0.0
    %1040 = vmatprep.subr.mxu0 0.0
    %1041 = vmatpush1.msra.mxu0 0.0
    %1042 = vmatprep.subr.mxu0 0.0
    %1043 = vmatpush1.msra.mxu0 0.0
    %1044 = vmatprep.subr.mxu0 0.0
    %1045 = vmatpush1.msra.mxu0 0.0
    %1046 = vmatprep.subr.mxu0 0.0
    %1047 = vmatpush1.msra.mxu0 0.0
    %1048 = vmatprep.subr.mxu0 0.0
    %1049 = vmatpush1.msra.mxu0 0.0
    %1050 = vmatprep.subr.mxu0 0.0
    %1051 = vmatpush1.msra.mxu0 0.0
    %1052 = vmatprep.subr.mxu0 0.0
    %1053 = vmatpush1.msra.mxu0 0.0
    %1054 = vmatprep.subr.mxu0 0.0
    %1055 = vmatpush1.msra.mxu0 0.0
    %1056 = vmatprep.subr.mxu0 0.0
    %1057 = vmatpush1.msra.mxu0 0.0
    %1058 = vmatprep.subr.mxu0 0.0
    %1059 = vmatpush1.msra.mxu0 0.0
    %1060 = vmatprep.subr.mxu0 0.0
    %1061 = vmatpush1.msra.mxu0 0.0
    %1062 = vmatprep.mubr.f32.mxu0 0.0
    %1063 = vmatmul.mubr.f32.gmra.mrb[0].mxu0 %v996
    %v1064 = vpop.f32.mrb[0].mxu0
    %v1065 = vadd.f32 0.0, %v1064
    %v1066 = vpop.f32.mrb[0].mxu0
    %v1067 = vadd.f32 0.0, %v1066
    %1068 = vdwg.mxu0
    %v1069 = vsel %vm48, %v1065, 0.0
    %1070 = vadd.xlane.f32.xlu0 %v1069
    %v1071 = vpop.xlane.xlu0 %1070
    %v1072 = vmul.f32 %v1071, %v182
    %v1073 = vmul.f32 %v1065, %v1065
    %v1074 = vsel %vm48, %v1073, 0.0
    %1075 = vadd.xlane.f32.xlu0 %v1074
    %v1076 = vpop.xlane.xlu0 %1075
    %v1077 = vmul.f32 %v1076, %v182
    %v1078 = vmul.f32 %v1072, %v1072
    %v1079 = vsub.f32 %v1077, %v1078
    %v1080 = vmax.f32 %v1079, 0.0
    %v1081 = vadd.f32 %v1080, 0.001
    %v1082 = vrsqrt.pop %v1081
    %v1083 = vsel %vm48, %v1067, 0.0
    %1084 = vadd.xlane.f32.xlu0 %v1083
    %v1085 = vpop.xlane.xlu0 %1084
    %v1086 = vmul.f32 %v1085, %v182
    %v1087 = vmul.f32 %v1067, %v1067
    %v1088 = vsel %vm48, %v1087, 0.0
    %1089 = vadd.xlane.f32.xlu0 %v1088
    %v1090 = vpop.xlane.xlu0 %1089
    %v1091 = vmul.f32 %v1090, %v182
    %v1092 = vmul.f32 %v1086, %v1086
    %v1093 = vsub.f32 %v1091, %v1092
    %v1094 = vmax.f32 %v1093, 0.0
    %v1095 = vadd.f32 %v1094, 0.001
    %v1096 = vrsqrt.pop %v1095
    %v1097 = vmul.f32 %v1080, %v1082
    %v1098 = vmul.f32 %v1097, %v1082
    %v1099 = vadd.f32 %v1098, 0.0
    %v1100 = vmul.f32 %v1094, %v1096
    %v1101 = vmul.f32 %v1100, %v1096
    %v1102 = vadd.f32 %v1099, %v1101
    %v1103 = vmul.f32 %v1102, 0.5
    %v1104 = vadd.f32 %v1103, 1e-05
    %v1105 = vrsqrt.pop %v1104
    %v1106 = vmul.f32 %v1105, %v993
    %v1107 = vmul.f32 %v1082, %v1106
    %v1108 = vmul.f32 %v1072, %v1107
    %1110 = vrot.lane.b32.xlu0 %v1108, 1
    %v1111 = vpop.permute.xlu0 %1110
    %v1113 = vsub.f32 %v993, %v1111
    %1115 = vset.pattern.permute.xlu0 16
    %1116 = vperm.xlu0 %1115, %v1107
    %v1117 = vpop.permute.xlu0 %1116
    %v1119 = vmul.f32 %v1065, %v1117
    %1121 = vset.pattern.permute.xlu0 17
    %1122 = vperm.xlu0 %1121, %v1113
    %v1123 = vpop.permute.xlu0 %1122
    %v1125 = vadd.f32 %v1119, %v1123
    %v1126 = vmax.f32 %v1125, 0.0
    %v1127 = vmul.f32 %v1096, %v1106
    %v1128 = vmul.f32 %v1086, %v1127
    %1130 = vrot.lane.b32.xlu0 %v1128, 1
    %v1131 = vpop.permute.xlu0 %1130
    %v1133 = vsub.f32 %v993, %v1131
    %1135 = vset.pattern.permute.xlu0 16
    %1136 = vperm.xlu0 %1135, %v1127
    %v1137 = vpop.permute.xlu0 %1136
    %v1139 = vmul.f32 %v1067, %v1137
    %1141 = vset.pattern.permute.xlu0 17
    %1142 = vperm.xlu0 %1141, %v1133
    %v1143 = vpop.permute.xlu0 %1142
    %v1145 = vadd.f32 %v1139, %v1143
    %v1146 = vmax.f32 %v1145, 0.0
    %v1147 = vld [vmem:[%s1 + $0x58] sm:$0xf]
    %v1148 = vld [vmem:[%s1 + $0x58] sm:$0x1]
    %1150 = vset.pattern.permute.xlu0 0
    %1151 = vperm.xlu0 %1150, %v1147
    %v1152 = vpop.permute.xlu0 %1151
    %v1154 = vmul.f32 %v1126, %v1152
    %v1155 = vsel %vm48, %v1154, 0.0
    %v1156 = vrot.slane %v1155, 4
    %v1157 = vadd.f32 %v1155, %v1156
    %v1158 = vrot.slane %v1157, 2
    %v1159 = vadd.f32 %v1157, %v1158
    %v1160 = vrot.slane %v1159, 1
    %v1161 = vadd.f32 %v1159, %v1160
    %1163 = vset.pattern.permute.xlu0 1
    %1164 = vperm.xlu0 %1163, %v1148
    %v1165 = vpop.permute.xlu0 %1164
    %v1167 = vadd.f32 %v1161, %v1165
    %v1168 = vlaneseq
    %vm1169 = vcmp.ge.s32.totalorder %v1168, 0
    %vm1170 = vcmp.lt.s32.totalorder %v1168, 128
    %vm1171 = vmand %vm1169, %vm1170
    %1172 = vst.msk [vmem:[#allocation2] sm:$0x1] %vm1171, %v1167
    %v1173 = vmul.f32 %v1146, %v1152
    %v1174 = vsel %vm48, %v1173, 0.0
    %v1175 = vrot.slane %v1174, 4
    %v1176 = vadd.f32 %v1174, %v1175
    %v1177 = vrot.slane %v1176, 2
    %v1178 = vadd.f32 %v1176, %v1177
    %v1179 = vrot.slane %v1178, 1
    %v1180 = vadd.f32 %v1178, %v1179
    %v1181 = vadd.f32 %v1180, %v1165
    %1182 = vst.msk [vmem:[#allocation2 + $0x1] sm:$0x1] %vm1171, %v1181
    // Predicated region
    $region10: #{inliner_predictor.1} parent=1 // pred_check
      _
    $region11: #{inliner_predictor.1} parent=1 // pred_check_branch
      %1184 = sbr.rel (0) target = $region13
    $region12: #{inliner_predictor.1} parent=1 // pred_region
      %s1186 = ssub.s32 32, 32
      %1187 = vsyncadd [#allocation3], %s1186
      %s1189 = sshll.u32 [#allocation2], 4
      %s1190 = int_to_ptr.vmem [resolvable:$true] %s1189
      %1192 = dma.vmem_to_hbm [thread:$0]  %s1190, 32, %s2, [#allocation3]
    $region13: #{inliner_predictor.1} parent=1 // pred_fallthru
      _
    // Predicated region
    $region14: #{inliner_predictor.1} parent=1 // pred_check
      _
    $region15: #{inliner_predictor.1} parent=1 // pred_check_branch
      %1194 = sbr.rel (0) target = $region17
    $region16: #{inliner_predictor.1} parent=1 // pred_region
      %1195 = dma.done [#allocation3], 32
    $region17: #{inliner_predictor.1} parent=1 // pred_fallthru
      _
    %1196 = vsyncpa [#allocation3], 1

</llo_original>
